<compile_context>
chip_gen: v6e
topology: v6e:2x2x1
jax: 0.10.0
libtpu: 0.0.40
codegen_flags: <defaults>
</compile_context>

<pallas_src>
import jax
import jax.numpy as jnp
from jax.experimental import pallas as pl
from jax.experimental.pallas import tpu as pltpu


def _multi_output_kernel(x_ref, w1_ref, w2_ref, sin_ref, cos_ref):
    # Two MXU matmuls (f32 acc) + VPU relu + sin/cos epilogue, all lane-dense.
    x = x_ref[...]
    w1 = w1_ref[...]
    w2 = w2_ref[...]

    z = jnp.dot(x, w1, preferred_element_type=jnp.float32)
    z = jnp.maximum(z, 0.0)                       # relu
    z = jnp.dot(z, w2, preferred_element_type=jnp.float32)

    sin_ref[...] = jnp.sin(z).astype(sin_ref.dtype)
    cos_ref[...] = jnp.cos(z).astype(cos_ref.dtype)


def _round_up(n: int, m: int) -> int:
    return ((n + m - 1) // m) * m


def multi_output_forward(x: jax.Array, w1: jax.Array, w2: jax.Array):
    B, D = x.shape
    assert w1.shape == (D, D) and w2.shape == (D, D)

    # Lane-dense / sublane-aligned padded shapes.
    Dp = _round_up(D, 128)   # lane (last) dim -> multiple of 128
    Bp = _round_up(B, 8)     # sublane dim -> multiple of 8 (f32)

    x_p = jnp.pad(x, ((0, Bp - B), (0, Dp - D)))
    w1_p = jnp.pad(w1, ((0, Dp - D), (0, Dp - D)))
    w2_p = jnp.pad(w2, ((0, Dp - D), (0, Dp - D)))

    out_shape = (
        jax.ShapeDtypeStruct((Bp, Dp), x.dtype),
        jax.ShapeDtypeStruct((Bp, Dp), x.dtype),
    )

    # Full-array blocks (block_shape == array shape, now (8,128)-aligned),
    # single grid point — everything stays VMEM-resident for the whole call.
    full = lambda shape: pl.BlockSpec(shape, lambda: (0, 0))

    bytes_accessed = 4 * (3 * Bp * Dp + 2 * Dp * Dp)          # x, sin, cos, w1, w2
    cost = pl.CostEstimate(
        flops=2 * 2 * Bp * Dp * Dp,                           # two matmuls
        transcendentals=2 * Bp * Dp,                          # sin + cos
        bytes_accessed=bytes_accessed,
    )

    sin_p, cos_p = pl.pallas_call(
        _multi_output_kernel,
        out_shape=out_shape,
        in_specs=[full((Bp, Dp)), full((Dp, Dp)), full((Dp, Dp))],
        out_specs=[full((Bp, Dp)), full((Bp, Dp))],
        cost_estimate=cost,
    )(x_p, w1_p, w2_p)

    # Slice back to the logical (un-padded) shapes.
    return sin_p[:B, :D], cos_p[:B, :D]


def _reference(x, w1, w2):
    z = jnp.maximum(x @ w1, 0.0) @ w2
    return jnp.sin(z), jnp.cos(z)


if __name__ == "__main__":
    key = jax.random.PRNGKey(0)
    kx, k1, k2 = jax.random.split(key, 3)

    B, D = 8, 100  # module hardcodes 100x100 weights
    x = jax.random.normal(kx, (B, D), dtype=jnp.float32)
    w1 = jax.random.normal(k1, (D, D), dtype=jnp.float32)
    w2 = jax.random.normal(k2, (D, D), dtype=jnp.float32)

    sin_out, cos_out = multi_output_forward(x, w1, w2)
    jax.block_until_ready((sin_out, cos_out))

    ref_sin, ref_cos = _reference(x, w1, w2)
    assert sin_out.shape == (B, D) and cos_out.shape == (B, D)
    assert jnp.allclose(sin_out, ref_sin, atol=1e-4, rtol=1e-4)
    assert jnp.allclose(cos_out, ref_cos, atol=1e-4, rtol=1e-4)

    print("KERNEL_OK")
</pallas_src>

<mosaic_0001>
module attributes {stable_mosaic.version = 11 : i64} {
  func.func @_multi_output_kernel(%arg0: memref<8x128xf32, #tpu.memory_space<vmem>>, %arg1: memref<128x128xf32, #tpu.memory_space<vmem>>, %arg2: memref<128x128xf32, #tpu.memory_space<vmem>>, %arg3: memref<8x128xf32, #tpu.memory_space<vmem>>, %arg4: memref<8x128xf32, #tpu.memory_space<vmem>>) attributes {dimension_semantics = [], scalar_prefetch = 0 : i64, scratch_operands = 0 : i64, tpu.core_type = #tpu.core_type<tc>} {
    %c0 = arith.constant 0 : index
    %c0_0 = arith.constant 0 : index
    %0 = vector.load %arg0[%c0, %c0_0] : memref<8x128xf32, #tpu.memory_space<vmem>>, vector<8x128xf32>
    %c0_1 = arith.constant 0 : index
    %c0_2 = arith.constant 0 : index
    %1 = vector.load %arg1[%c0_1, %c0_2] : memref<128x128xf32, #tpu.memory_space<vmem>>, vector<128x128xf32>
    %c0_3 = arith.constant 0 : index
    %c0_4 = arith.constant 0 : index
    %2 = vector.load %arg2[%c0_3, %c0_4] : memref<128x128xf32, #tpu.memory_space<vmem>>, vector<128x128xf32>
    %cst = arith.constant dense<0.000000e+00> : vector<8x128xf32>
    %3 = tpu.matmul %0, %1, %cst {dimension_numbers = #tpu.dot_dimension_numbers<[1], [0], [0], [1], [0, 0, 1, 1], [], []>} : vector<8x128xf32>, vector<128x128xf32>, vector<8x128xf32> -> vector<8x128xf32>
    %cst_5 = arith.constant 0.000000e+00 : f32
    %4 = vector.broadcast %cst_5 : f32 to vector<8x128xf32>
    %5 = arith.maximumf %3, %4 : vector<8x128xf32>
    %cst_6 = arith.constant dense<0.000000e+00> : vector<8x128xf32>
    %6 = tpu.matmul %5, %2, %cst_6 {dimension_numbers = #tpu.dot_dimension_numbers<[1], [0], [0], [1], [0, 0, 1, 1], [], []>} : vector<8x128xf32>, vector<128x128xf32>, vector<8x128xf32> -> vector<8x128xf32>
    %7 = math.sin %6 : vector<8x128xf32>
    %c0_7 = arith.constant 0 : index
    %c0_8 = arith.constant 0 : index
    %8 = vector.load %arg3[%c0_7, %c0_8] : memref<8x128xf32, #tpu.memory_space<vmem>>, vector<8x128xf32>
    tpu.vector_store %arg3[%c0_7, %c0_8], %7 {strides = array<i32>} : memref<8x128xf32, #tpu.memory_space<vmem>>, vector<8x128xf32>,
    %9 = math.cos %6 : vector<8x128xf32>
    %c0_9 = arith.constant 0 : index
    %c0_10 = arith.constant 0 : index
    %10 = vector.load %arg4[%c0_9, %c0_10] : memref<8x128xf32, #tpu.memory_space<vmem>>, vector<8x128xf32>
    tpu.vector_store %arg4[%c0_9, %c0_10], %9 {strides = array<i32>} : memref<8x128xf32, #tpu.memory_space<vmem>>, vector<8x128xf32>,
    return
  }
}

</mosaic_0001>

<llo_original>
// kernel: tpu_custom_call.1
$region0: #{tpu_custom_call.1}
  #allocation0 [shape = 'u32[]', space=smem, size = 0x4, offset = 0x4, fixed_abs, tag = 'smem constant byte address 0x4 - core index']
  #allocation1 [shape = 'u32[144,128]{1,0:T(1,128)}', space=vmem, size = 0x12000, scoped, tag = 'internal scratch']
  %s0 = inlined_call_operand.hbm [shape: f32[8,128], index: 0, kind: input, shape index: {}]
  %s1 = inlined_call_operand.hbm [shape: f32[128,128], index: 1, kind: input, shape index: {}]
  %s2 = inlined_call_operand.hbm [shape: f32[128,128], index: 2, kind: input, shape index: {}]
  %s3 = inlined_call_operand.hbm [shape: f32[8,128], index: 3, kind: output, shape index: {0}]
  %s4 = inlined_call_operand.hbm [shape: f32[8,128], index: 4, kind: output, shape index: {1}]
  %5 = xla_tuple %s3, %s4
  %s6 = sld [smem:[#allocation0]]
  $region42: #{tpu_custom_call.1} parent=0
    _
  %s8 = ssub.s32 1, %s6
  %s9 = scalar_select 0, %s8, %s6
  $region1: #{tpu_custom_call.1} parent=0
    #allocation2 [shape = 'u8[4096]{0}', space=vmem, size = 0x1000, scoped, tag = 'input window, operand 0, single buffered']
    #allocation3 [shape = 's32[1]{0}', space=sflag, size = 0x4, scoped, tag = 'scoped memory for tpu_custom_call.1']
    #allocation4 [shape = 's32[1]{0}', space=sflag, size = 0x4, scoped, tag = 'scoped memory for tpu_custom_call.1']
    #allocation5 [shape = 'u8[65536]{0}', space=vmem, size = 0x10000, scoped, tag = 'input window, operand 1, single buffered']
    #allocation6 [shape = 's32[1]{0}', space=sflag, size = 0x4, scoped, tag = 'scoped memory for tpu_custom_call.1']
    #allocation7 [shape = 'u8[65536]{0}', space=vmem, size = 0x10000, scoped, tag = 'input window, operand 2, single buffered']
    #allocation8 [shape = 'u8[4096]{0}', space=vmem, size = 0x1000, scoped, tag = 'output window, operand 0, single buffered']
    #allocation9 [shape = 'u8[4096]{0}', space=vmem, size = 0x1000, scoped, tag = 'output window, operand 1, single buffered']
    #allocation10 [shape = 's32[1]{0}', space=sflag, size = 0x4, scoped, tag = 'scoped memory for tpu_custom_call.1']
    %10 = vsyncpa [#allocation3], 0
    %11 = vsyncpa [#allocation6], 0
    %12 = vsyncpa [#allocation4], 0
    %13 = vsyncpa [#allocation10], 0
    // Predicated region
    $region2: #{tpu_custom_call.1} parent=1 // pred_check
      _
    $region3: #{tpu_custom_call.1} parent=1 // pred_check_branch
      %15 = sbr.rel (0) target = $region5
    $region4: #{tpu_custom_call.1} parent=1 // pred_region
      %s17 = ssub.s32 128, 128
      %18 = vsyncadd [#allocation3], %s17
      %s20 = sshll.u32 [#allocation2], 4
      %s21 = int_to_ptr.vmem [resolvable:$true] %s20
      %23 = dma.hbm_to_vmem [thread:$0]  %s0, 128, %s21, [#allocation3]
    $region5: #{tpu_custom_call.1} parent=1 // pred_fallthru
      _
    // Predicated region
    $region6: #{tpu_custom_call.1} parent=1 // pred_check
      _
    $region7: #{tpu_custom_call.1} parent=1 // pred_check_branch
      %25 = sbr.rel (0) target = $region9
    $region8: #{tpu_custom_call.1} parent=1 // pred_region
      %s27 = ssub.s32 2048, 2048
      %28 = vsyncadd [#allocation6], %s27
      %s29 = sshll.u32 [#allocation5], 4
      %s30 = int_to_ptr.vmem [resolvable:$true] %s29
      %35 = dma.hbm_to_vmem [thread:$0]  %s1, 2048, %s30, [#allocation6], 128, 128, 8
    $region9: #{tpu_custom_call.1} parent=1 // pred_fallthru
      _
    // Predicated region
    $region10: #{tpu_custom_call.1} parent=1 // pred_check
      _
    $region11: #{tpu_custom_call.1} parent=1 // pred_check_branch
      %37 = sbr.rel (0) target = $region13
    $region12: #{tpu_custom_call.1} parent=1 // pred_region
      %s39 = ssub.s32 2048, 2048
      %40 = vsyncadd [#allocation6], %s39
      %s41 = sshll.u32 [#allocation7], 4
      %s42 = int_to_ptr.vmem [resolvable:$true] %s41
      %47 = dma.hbm_to_vmem [thread:$0]  %s2, 2048, %s42, [#allocation6], 128, 128, 8
    $region13: #{tpu_custom_call.1} parent=1 // pred_fallthru
      _
    // Predicated region
    $region14: #{tpu_custom_call.1} parent=1 // pred_check
      _
    $region15: #{tpu_custom_call.1} parent=1 // pred_check_branch
      %49 = sbr.rel (0) target = $region17
    $region16: #{tpu_custom_call.1} parent=1 // pred_region
      %50 = dma.done [#allocation3], 128
    $region17: #{tpu_custom_call.1} parent=1 // pred_fallthru
      _
    // Predicated region
    $region18: #{tpu_custom_call.1} parent=1 // pred_check
      _
    $region19: #{tpu_custom_call.1} parent=1 // pred_check_branch
      %52 = sbr.rel (0) target = $region21
    $region20: #{tpu_custom_call.1} parent=1 // pred_region
      %53 = dma.done [#allocation6], 2048
    $region21: #{tpu_custom_call.1} parent=1 // pred_fallthru
      _
    // Predicated region
    $region22: #{tpu_custom_call.1} parent=1 // pred_check
      _
    $region23: #{tpu_custom_call.1} parent=1 // pred_check_branch
      %55 = sbr.rel (0) target = $region25
    $region24: #{tpu_custom_call.1} parent=1 // pred_region
      %56 = dma.done [#allocation6], 2048
    $region25: #{tpu_custom_call.1} parent=1 // pred_fallthru
      _
    %v57 = vld [vmem:[#allocation2] sm:$0xff]
    %v58 = vld [vmem:[#allocation5] sm:$0xff]
    %v59 = vld [vmem:[#allocation5 + $0x8] sm:$0xff]
    %v60 = vld [vmem:[#allocation5 + $0x10] sm:$0xff]
    %v61 = vld [vmem:[#allocation5 + $0x18] sm:$0xff]
    %v62 = vld [vmem:[#allocation5 + $0x20] sm:$0xff]
    %v63 = vld [vmem:[#allocation5 + $0x28] sm:$0xff]
    %v64 = vld [vmem:[#allocation5 + $0x30] sm:$0xff]
    %v65 = vld [vmem:[#allocation5 + $0x38] sm:$0xff]
    %v66 = vld [vmem:[#allocation5 + $0x40] sm:$0xff]
    %v67 = vld [vmem:[#allocation5 + $0x48] sm:$0xff]
    %v68 = vld [vmem:[#allocation5 + $0x50] sm:$0xff]
    %v69 = vld [vmem:[#allocation5 + $0x58] sm:$0xff]
    %v70 = vld [vmem:[#allocation5 + $0x60] sm:$0xff]
    %v71 = vld [vmem:[#allocation5 + $0x68] sm:$0xff]
    %v72 = vld [vmem:[#allocation5 + $0x70] sm:$0xff]
    %v73 = vld [vmem:[#allocation5 + $0x78] sm:$0xff]
    %v74 = vld [vmem:[#allocation7] sm:$0xff]
    %v75 = vld [vmem:[#allocation7 + $0x8] sm:$0xff]
    %v76 = vld [vmem:[#allocation7 + $0x10] sm:$0xff]
    %v77 = vld [vmem:[#allocation7 + $0x18] sm:$0xff]
    %v78 = vld [vmem:[#allocation7 + $0x20] sm:$0xff]
    %v79 = vld [vmem:[#allocation7 + $0x28] sm:$0xff]
    %v80 = vld [vmem:[#allocation7 + $0x30] sm:$0xff]
    %v81 = vld [vmem:[#allocation7 + $0x38] sm:$0xff]
    %v82 = vld [vmem:[#allocation7 + $0x40] sm:$0xff]
    %v83 = vld [vmem:[#allocation7 + $0x48] sm:$0xff]
    %v84 = vld [vmem:[#allocation7 + $0x50] sm:$0xff]
    %v85 = vld [vmem:[#allocation7 + $0x58] sm:$0xff]
    %v86 = vld [vmem:[#allocation7 + $0x60] sm:$0xff]
    %v87 = vld [vmem:[#allocation7 + $0x68] sm:$0xff]
    %v88 = vld [vmem:[#allocation7 + $0x70] sm:$0xff]
    %v89 = vld [vmem:[#allocation7 + $0x78] sm:$0xff]
    %90 = vmatprep.subr.mxu0 0.0
    %91 = vmatpush1.msra.mxu0 %v73
    %92 = vmatprep.subr.mxu0 0.0
    %93 = vmatpush1.msra.mxu0 %v72
    %94 = vmatprep.subr.mxu0 0.0
    %95 = vmatpush1.msra.mxu0 %v71
    %96 = vmatprep.subr.mxu0 0.0
    %97 = vmatpush1.msra.mxu0 %v70
    %98 = vmatprep.subr.mxu0 0.0
    %99 = vmatpush1.msra.mxu0 %v69
    %100 = vmatprep.subr.mxu0 0.0
    %101 = vmatpush1.msra.mxu0 %v68
    %102 = vmatprep.subr.mxu0 0.0
    %103 = vmatpush1.msra.mxu0 %v67
    %104 = vmatprep.subr.mxu0 0.0
    %105 = vmatpush1.msra.mxu0 %v66
    %106 = vmatprep.subr.mxu0 0.0
    %107 = vmatpush1.msra.mxu0 %v65
    %108 = vmatprep.subr.mxu0 0.0
    %109 = vmatpush1.msra.mxu0 %v64
    %110 = vmatprep.subr.mxu0 0.0
    %111 = vmatpush1.msra.mxu0 %v63
    %112 = vmatprep.subr.mxu0 0.0
    %113 = vmatpush1.msra.mxu0 %v62
    %114 = vmatprep.subr.mxu0 0.0
    %115 = vmatpush1.msra.mxu0 %v61
    %116 = vmatprep.subr.mxu0 0.0
    %117 = vmatpush1.msra.mxu0 %v60
    %118 = vmatprep.subr.mxu0 0.0
    %119 = vmatpush1.msra.mxu0 %v59
    %120 = vmatprep.subr.mxu0 0.0
    %121 = vmatpush1.msra.mxu0 %v58
    %122 = vmatprep.subr.mxu0 0.0
    %123 = vmatpush2.msra.mxu0 0.0
    %124 = vmatprep.subr.mxu0 0.0
    %125 = vmatpush2.msra.mxu0 0.0
    %126 = vmatprep.subr.mxu0 0.0
    %127 = vmatpush2.msra.mxu0 0.0
    %128 = vmatprep.subr.mxu0 0.0
    %129 = vmatpush2.msra.mxu0 0.0
    %130 = vmatprep.subr.mxu0 0.0
    %131 = vmatpush2.msra.mxu0 0.0
    %132 = vmatprep.subr.mxu0 0.0
    %133 = vmatpush2.msra.mxu0 0.0
    %134 = vmatprep.subr.mxu0 0.0
    %135 = vmatpush2.msra.mxu0 0.0
    %136 = vmatprep.subr.mxu0 0.0
    %137 = vmatpush2.msra.mxu0 0.0
    %138 = vmatprep.subr.mxu0 0.0
    %139 = vmatpush2.msra.mxu0 0.0
    %140 = vmatprep.subr.mxu0 0.0
    %141 = vmatpush2.msra.mxu0 0.0
    %142 = vmatprep.subr.mxu0 0.0
    %143 = vmatpush2.msra.mxu0 0.0
    %144 = vmatprep.subr.mxu0 0.0
    %145 = vmatpush2.msra.mxu0 0.0
    %146 = vmatprep.subr.mxu0 0.0
    %147 = vmatpush2.msra.mxu0 0.0
    %148 = vmatprep.subr.mxu0 0.0
    %149 = vmatpush2.msra.mxu0 0.0
    %150 = vmatprep.subr.mxu0 0.0
    %151 = vmatpush2.msra.mxu0 0.0
    %152 = vmatprep.subr.mxu0 0.0
    %153 = vmatpush2.msra.mxu0 0.0
    %154 = vmatprep.mubr.f32.mxu0 0.0
    %155 = vmatmul.mubr.f32.gmra.mxu0 %v57
    %v156 = vpop.f32.mrf.mxu0
    %v157 = vadd.f32 0.0, %v156
    %v158 = vpop.f32.mrf.mxu0
    %159 = vdwg.mxu0
    %v160 = vmax.f32 %v157, 0.0
    %161 = vmatprep.subr.mxu0 0.0
    %162 = vmatpush1.msra.mxu0 %v89
    %163 = vmatprep.subr.mxu0 0.0
    %164 = vmatpush1.msra.mxu0 %v88
    %165 = vmatprep.subr.mxu0 0.0
    %166 = vmatpush1.msra.mxu0 %v87
    %167 = vmatprep.subr.mxu0 0.0
    %168 = vmatpush1.msra.mxu0 %v86
    %169 = vmatprep.subr.mxu0 0.0
    %170 = vmatpush1.msra.mxu0 %v85
    %171 = vmatprep.subr.mxu0 0.0
    %172 = vmatpush1.msra.mxu0 %v84
    %173 = vmatprep.subr.mxu0 0.0
    %174 = vmatpush1.msra.mxu0 %v83
    %175 = vmatprep.subr.mxu0 0.0
    %176 = vmatpush1.msra.mxu0 %v82
    %177 = vmatprep.subr.mxu0 0.0
    %178 = vmatpush1.msra.mxu0 %v81
    %179 = vmatprep.subr.mxu0 0.0
    %180 = vmatpush1.msra.mxu0 %v80
    %181 = vmatprep.subr.mxu0 0.0
    %182 = vmatpush1.msra.mxu0 %v79
    %183 = vmatprep.subr.mxu0 0.0
    %184 = vmatpush1.msra.mxu0 %v78
    %185 = vmatprep.subr.mxu0 0.0
    %186 = vmatpush1.msra.mxu0 %v77
    %187 = vmatprep.subr.mxu0 0.0
    %188 = vmatpush1.msra.mxu0 %v76
    %189 = vmatprep.subr.mxu0 0.0
    %190 = vmatpush1.msra.mxu0 %v75
    %191 = vmatprep.subr.mxu0 0.0
    %192 = vmatpush1.msra.mxu0 %v74
    %193 = vmatprep.subr.mxu0 0.0
    %194 = vmatpush2.msra.mxu0 0.0
    %195 = vmatprep.subr.mxu0 0.0
    %196 = vmatpush2.msra.mxu0 0.0
    %197 = vmatprep.subr.mxu0 0.0
    %198 = vmatpush2.msra.mxu0 0.0
    %199 = vmatprep.subr.mxu0 0.0
    %200 = vmatpush2.msra.mxu0 0.0
    %201 = vmatprep.subr.mxu0 0.0
    %202 = vmatpush2.msra.mxu0 0.0
    %203 = vmatprep.subr.mxu0 0.0
    %204 = vmatpush2.msra.mxu0 0.0
    %205 = vmatprep.subr.mxu0 0.0
    %206 = vmatpush2.msra.mxu0 0.0
    %207 = vmatprep.subr.mxu0 0.0
    %208 = vmatpush2.msra.mxu0 0.0
    %209 = vmatprep.subr.mxu0 0.0
    %210 = vmatpush2.msra.mxu0 0.0
    %211 = vmatprep.subr.mxu0 0.0
    %212 = vmatpush2.msra.mxu0 0.0
    %213 = vmatprep.subr.mxu0 0.0
    %214 = vmatpush2.msra.mxu0 0.0
    %215 = vmatprep.subr.mxu0 0.0
    %216 = vmatpush2.msra.mxu0 0.0
    %217 = vmatprep.subr.mxu0 0.0
    %218 = vmatpush2.msra.mxu0 0.0
    %219 = vmatprep.subr.mxu0 0.0
    %220 = vmatpush2.msra.mxu0 0.0
    %221 = vmatprep.subr.mxu0 0.0
    %222 = vmatpush2.msra.mxu0 0.0
    %223 = vmatprep.subr.mxu0 0.0
    %224 = vmatpush2.msra.mxu0 0.0
    %225 = vmatprep.mubr.f32.mxu0 0.0
    %226 = vmatmul.mubr.f32.gmra.mxu0 %v160
    %v227 = vpop.f32.mrf.mxu0
    %v228 = vadd.f32 0.0, %v227
    %v229 = vpop.f32.mrf.mxu0
    %230 = vdwg.mxu0
    %v231 = vand.u32 2147483647, %v228
    %vm232 = vcmp.le.f32.partialorder %v231, 0.7853982
    %vm233 = vcmp.lt.s32.totalorder %v228, 0
    %v234 = vand.u32 %v228, 2139095040
    %v235 = vshrl.u32 %v234, 23
    %v236 = vsub.s32 %v235, 127
    %v237 = vand.u32 2147483647, %v228
    %v238 = vand.u32 %v237, 8388607
    %v239 = vor.u32 %v238, 8388608
    %v240 = vsub.s32 0, %v239
    %v241 = vadd.s32 %v236, 1
    %vm242 = vcmp.gt.s32.totalorder %v241, 0
    %v243 = vsel %vm242, %v241, 0
    %v244 = vshrl.u32 %v243, 5
    %v245 = vand.u32 %v243, 31
    %v246 = vsub.s32 32, %v245
    %v247 = vshrl.u32 683565275, %v246
    %v248 = vshll.u32 683565275, %v245
    %v249 = vshrl.u32 2475754826, %v246
    %v250 = vor.u32 %v248, %v249
    %v251 = vshll.u32 2475754826, %v245
    %v252 = vshrl.u32 2131351028, %v246
    %v253 = vor.u32 %v251, %v252
    %v254 = vshll.u32 2131351028, %v245
    %v255 = vshrl.u32 2102212464, %v246
    %v256 = vor.u32 %v254, %v255
    %v257 = vshll.u32 2102212464, %v245
    %v258 = vshrl.u32 920167782, %v246
    %v259 = vor.u32 %v257, %v258
    %v260 = vshll.u32 920167782, %v245
    %v261 = vshrl.u32 1326507024, %v246
    %v262 = vor.u32 %v260, %v261
    %vm263 = vcmp.lt.s32.totalorder %v244, 1
    %vm264 = vcmp.lt.s32.totalorder %v244, 2
    %vm265 = vcmp.lt.s32.totalorder %v244, 3
    %vm266 = vcmp.lt.s32.totalorder %v244, 4
    %v267 = vsel %vm263, %v247, %v250
    %v268 = vsel %vm266, %v256, 2102212464
    %v269 = vsel %vm265, %v253, %v268
    %v270 = vsel %vm264, %v267, %v269
    %v271 = vsel %vm263, %v250, %v253
    %v272 = vsel %vm266, %v259, 920167782
    %v273 = vsel %vm265, %v256, %v272
    %v274 = vsel %vm264, %v271, %v273
    %v275 = vsel %vm263, %v253, %v256
    %v276 = vsel %vm266, %v262, 1326507024
    %v277 = vsel %vm265, %v259, %v276
    %v278 = vsel %vm264, %v275, %v277
    %v279 = vshll.u32 %v239, 8
    %v280 = vmul.u32.u64.compose %v279, %v278
    %v281 = vextract.low.u32 %v280
    %v282 = vextract.high.u32 %v280
    %v283 = vmul.u32.u64.compose %v279, %v274
    %v284 = vextract.low.u32 %v283
    %v285 = vextract.high.u32 %v283
    %v286 = vmul.u32 %v279, %v270
    %v287 = vadd.s32 %v282, %v284
    %vm288 = vc.u32 %v282, %v284
    %v289 = vadd.s32 %v285, 1
    %v290 = vsel %vm288, %v289, %v285
    %v291 = vadd.s32 %v286, %v290
    %v292 = vadd.s32 %v291, 536870912
    %v293 = vshrl.u32 %v292, 30
    %v294 = vshll.u32 %v293, 30
    %v295 = vsub.s32 %v291, %v294
    %vm296 = vcmp.lt.s32.totalorder %v295, 0
    %v297 = vsub.s32 0, %v295
    %v298 = vsel %vm296, %v297, %v295
    %v299 = vclz %v298
    %v300 = vsub.s32 %v299, 2
    %vm301 = vcmp.gt.s32.totalorder 0, %v300
    %v302 = vsel %vm301, 0, %v300
    %v303 = vsub.s32 32, %v302
    %v304 = vshll.u32 %v295, %v302
    %v305 = vshrl.u32 %v287, %v303
    %v306 = vor.u32 %v304, %v305
    %v307 = vsub.s32 4294967266, %v302
    %v308 = vadd.s32 %v307, 127
    %v309 = vshll.u32 %v308, 23
    %v310 = vor.u32 4788187, %v309
    %v311 = vand.u32 2147483647, %v310
    %v313 = vcvt.s32.f32 %v306
    %v314 = vmul.f32 %v313, %v311
    %v315 = vxor.u32 %v314, 2147483648
    %v316 = vsel %vm233, %v315, %v314
    %v317 = vsub.s32 4, %v293
    %v318 = vsel %vm233, %v317, %v293
    %v319 = vsel %vm232, %v228, %v316
    %v320 = vsel %vm232, 0, %v318
    %v321 = vcosq.f32.pop %v319
    %v322 = vsinq.f32.pop %v319
    %vm323 = vweird.f32 %v228
    %v324 = vadd.s32 %v320, 3
    %v325 = vand.u32 %v324, 3
    %vm326 = vcmp.lt.s32.totalorder %v325, 2
    %vm327 = vcmp.eq.s32.totalorder %v325, 0
    %v328 = vxor.u32 %v322, 2147483648
    %v329 = vsel %vm327, %v321, %v328
    %vm330 = vcmp.eq.s32.totalorder %v325, 2
    %v331 = vxor.u32 %v321, 2147483648
    %v332 = vsel %vm330, %v331, %v322
    %v333 = vsel %vm326, %v329, %v332
    %v334 = vsel %vm323, nan, %v333
    %335 = vst [vmem:[#allocation8] sm:$0xff] %v334
    %v336 = vand.u32 2147483647, %v228
    %vm337 = vcmp.le.f32.partialorder %v336, 0.7853982
    %vm338 = vcmp.lt.s32.totalorder %v228, 0
    %v339 = vand.u32 %v228, 2139095040
    %v340 = vshrl.u32 %v339, 23
    %v341 = vsub.s32 %v340, 127
    %v342 = vand.u32 2147483647, %v228
    %v343 = vand.u32 %v342, 8388607
    %v344 = vor.u32 %v343, 8388608
    %v345 = vsub.s32 0, %v344
    %v346 = vadd.s32 %v341, 1
    %vm347 = vcmp.gt.s32.totalorder %v346, 0
    %v348 = vsel %vm347, %v346, 0
    %v349 = vshrl.u32 %v348, 5
    %v350 = vand.u32 %v348, 31
    %v351 = vsub.s32 32, %v350
    %v352 = vshrl.u32 683565275, %v351
    %v353 = vshll.u32 683565275, %v350
    %v354 = vshrl.u32 2475754826, %v351
    %v355 = vor.u32 %v353, %v354
    %v356 = vshll.u32 2475754826, %v350
    %v357 = vshrl.u32 2131351028, %v351
    %v358 = vor.u32 %v356, %v357
    %v359 = vshll.u32 2131351028, %v350
    %v360 = vshrl.u32 2102212464, %v351
    %v361 = vor.u32 %v359, %v360
    %v362 = vshll.u32 2102212464, %v350
    %v363 = vshrl.u32 920167782, %v351
    %v364 = vor.u32 %v362, %v363
    %v365 = vshll.u32 920167782, %v350
    %v366 = vshrl.u32 1326507024, %v351
    %v367 = vor.u32 %v365, %v366
    %vm368 = vcmp.lt.s32.totalorder %v349, 1
    %vm369 = vcmp.lt.s32.totalorder %v349, 2
    %vm370 = vcmp.lt.s32.totalorder %v349, 3
    %vm371 = vcmp.lt.s32.totalorder %v349, 4
    %v372 = vsel %vm368, %v352, %v355
    %v373 = vsel %vm371, %v361, 2102212464
    %v374 = vsel %vm370, %v358, %v373
    %v375 = vsel %vm369, %v372, %v374
    %v376 = vsel %vm368, %v355, %v358
    %v377 = vsel %vm371, %v364, 920167782
    %v378 = vsel %vm370, %v361, %v377
    %v379 = vsel %vm369, %v376, %v378
    %v380 = vsel %vm368, %v358, %v361
    %v381 = vsel %vm371, %v367, 1326507024
    %v382 = vsel %vm370, %v364, %v381
    %v383 = vsel %vm369, %v380, %v382
    %v384 = vshll.u32 %v344, 8
    %v385 = vmul.u32.u64.compose %v384, %v383
    %v386 = vextract.low.u32 %v385
    %v387 = vextract.high.u32 %v385
    %v388 = vmul.u32.u64.compose %v384, %v379
    %v389 = vextract.low.u32 %v388
    %v390 = vextract.high.u32 %v388
    %v391 = vmul.u32 %v384, %v375
    %v392 = vadd.s32 %v387, %v389
    %vm393 = vc.u32 %v387, %v389
    %v394 = vadd.s32 %v390, 1
    %v395 = vsel %vm393, %v394, %v390
    %v396 = vadd.s32 %v391, %v395
    %v397 = vadd.s32 %v396, 536870912
    %v398 = vshrl.u32 %v397, 30
    %v399 = vshll.u32 %v398, 30
    %v400 = vsub.s32 %v396, %v399
    %vm401 = vcmp.lt.s32.totalorder %v400, 0
    %v402 = vsub.s32 0, %v400
    %v403 = vsel %vm401, %v402, %v400
    %v404 = vclz %v403
    %v405 = vsub.s32 %v404, 2
    %vm406 = vcmp.gt.s32.totalorder 0, %v405
    %v407 = vsel %vm406, 0, %v405
    %v408 = vsub.s32 32, %v407
    %v409 = vshll.u32 %v400, %v407
    %v410 = vshrl.u32 %v392, %v408
    %v411 = vor.u32 %v409, %v410
    %v412 = vsub.s32 4294967266, %v407
    %v413 = vadd.s32 %v412, 127
    %v414 = vshll.u32 %v413, 23
    %v415 = vor.u32 4788187, %v414
    %v416 = vand.u32 2147483647, %v415
    %v418 = vcvt.s32.f32 %v411
    %v419 = vmul.f32 %v418, %v416
    %v420 = vxor.u32 %v419, 2147483648
    %v421 = vsel %vm338, %v420, %v419
    %v422 = vsub.s32 4, %v398
    %v423 = vsel %vm338, %v422, %v398
    %v424 = vsel %vm337, %v228, %v421
    %v425 = vsel %vm337, 0, %v423
    %v426 = vcosq.f32.pop %v424
    %v427 = vsinq.f32.pop %v424
    %vm428 = vweird.f32 %v228
    %v429 = vand.u32 %v425, 3
    %vm430 = vcmp.lt.s32.totalorder %v429, 2
    %vm431 = vcmp.eq.s32.totalorder %v429, 0
    %v432 = vxor.u32 %v427, 2147483648
    %v433 = vsel %vm431, %v426, %v432
    %vm434 = vcmp.eq.s32.totalorder %v429, 2
    %v435 = vxor.u32 %v426, 2147483648
    %v436 = vsel %vm434, %v435, %v427
    %v437 = vsel %vm430, %v433, %v436
    %v438 = vsel %vm428, nan, %v437
    %439 = vst [vmem:[#allocation9] sm:$0xff] %v438
    // Predicated region
    $region26: #{tpu_custom_call.1} parent=1 // pred_check
      _
    $region27: #{tpu_custom_call.1} parent=1 // pred_check_branch
      %441 = sbr.rel (0) target = $region29
    $region28: #{tpu_custom_call.1} parent=1 // pred_region
      %s443 = ssub.s32 128, 128
      %444 = vsyncadd [#allocation4], %s443
      %s446 = sshll.u32 [#allocation8], 4
      %s447 = int_to_ptr.vmem [resolvable:$true] %s446
      %449 = dma.vmem_to_hbm [thread:$0]  %s447, 128, %s3, [#allocation4]
    $region29: #{tpu_custom_call.1} parent=1 // pred_fallthru
      _
    // Predicated region
    $region30: #{tpu_custom_call.1} parent=1 // pred_check
      _
    $region31: #{tpu_custom_call.1} parent=1 // pred_check_branch
      %451 = sbr.rel (0) target = $region33
    $region32: #{tpu_custom_call.1} parent=1 // pred_region
      %s453 = ssub.s32 128, 128
      %454 = vsyncadd [#allocation10], %s453
      %s456 = sshll.u32 [#allocation9], 4
      %s457 = int_to_ptr.vmem [resolvable:$true] %s456
      %459 = dma.vmem_to_hbm [thread:$0]  %s457, 128, %s4, [#allocation10]
    $region33: #{tpu_custom_call.1} parent=1 // pred_fallthru
      _
    // Predicated region
    $region34: #{tpu_custom_call.1} parent=1 // pred_check
      _
    $region35: #{tpu_custom_call.1} parent=1 // pred_check_branch
      %461 = sbr.rel (0) target = $region37
    $region36: #{tpu_custom_call.1} parent=1 // pred_region
      %462 = dma.done [#allocation4], 128
    $region37: #{tpu_custom_call.1} parent=1 // pred_fallthru
      _
    // Predicated region
    $region38: #{tpu_custom_call.1} parent=1 // pred_check
      _
    $region39: #{tpu_custom_call.1} parent=1 // pred_check_branch
      %464 = sbr.rel (0) target = $region41
    $region40: #{tpu_custom_call.1} parent=1 // pred_region
      %465 = dma.done [#allocation10], 128
    $region41: #{tpu_custom_call.1} parent=1 // pred_fallthru
      _
    %466 = vsyncpa [#allocation3], 1
    %467 = vsyncpa [#allocation6], 1
    %468 = vsyncpa [#allocation4], 1
    %469 = vsyncpa [#allocation10], 1

</llo_original>
